<compile_context>
chip_gen: v7x
topology: tpu7x:2x2x1
jax: 0.10.0
libtpu: 0.0.40
codegen_flags: <defaults>
</compile_context>

<pallas_src>
import jax
import jax.numpy as jnp
from jax.experimental import pallas as pl
from jax.experimental.pallas import tpu as pltpu

_LANE = 128
_LANE_SLAB = 8 * 128                    # 1024 elems: one full f32 vreg per row
_TARGET_TILE_BYTES = 2 * 1024 * 1024    # ~2 MiB tiles; x4 (in+out double buffers) ~= 8 MiB


def _copy_kernel(x_ref, o_ref):
    # Lane-dense VMEM tile copy (pure streaming, HBM-bandwidth bound).
    o_ref[...] = x_ref[...]


def _pick_2d_view(shape, n):
    """Pick a (rows, cols) view of the flat data that needs no pad or slice."""
    if n % _LANE_SLAB == 0:
        return n // _LANE_SLAB, _LANE_SLAB        # lane-dense slab, unmasked stores
    if len(shape) >= 2:
        cols = shape[-1]
        return n // cols, cols                    # lane-dense iff cols % 128 == 0
    return 1, n                                   # 1-D ragged: single full block


def _identity_copy(x: jax.Array) -> jax.Array:
    orig_shape = x.shape
    n = x.size
    if n == 0:
        return x

    rows, cols = _pick_2d_view(orig_shape, n)
    view = x.reshape(rows, cols)

    itemsize = jnp.dtype(x.dtype).itemsize
    sublane_mult = 8 * max(1, 4 // itemsize)      # 8 f32 / 16 bf16 / 32 int8+fp8
    bytes_per_row = max(1, cols * itemsize)

    if rows <= sublane_mult:
        tile_r = rows                             # full row dim: always a legal block
    else:
        tile_r = max(sublane_mult, _TARGET_TILE_BYTES // bytes_per_row)
        tile_r = (tile_r // sublane_mult) * sublane_mult
        tile_r = min(tile_r, rows)                # either == rows or a multiple of 8

    num_tiles = pl.cdiv(rows, tile_r)
    if num_tiles > 1 and num_tiles % 2 == 1 and tile_r > sublane_mult:
        # Nudge to an even tile count so both v7x TensorCores stay balanced.
        alt = pl.cdiv(pl.cdiv(rows, num_tiles + 1), sublane_mult) * sublane_mult
        if alt >= sublane_mult and pl.cdiv(rows, alt) % 2 == 0:
            tile_r = alt
            num_tiles = pl.cdiv(rows, alt)

    out_view = pl.pallas_call(
        _copy_kernel,
        out_shape=jax.ShapeDtypeStruct((rows, cols), x.dtype),
        grid=(num_tiles,),
        in_specs=[pl.BlockSpec((tile_r, cols), lambda i: (i, 0))],
        out_specs=pl.BlockSpec((tile_r, cols), lambda i: (i, 0)),
        compiler_params=pltpu.CompilerParams(
            dimension_semantics=("parallel",),
        ),
        cost_estimate=pl.CostEstimate(
            flops=0, transcendentals=0, bytes_accessed=2 * n * itemsize),
    )(view)
    return out_view.reshape(orig_shape)


def batch_identity(x: jax.Array, batch: jax.Array) -> jax.Array:
    """Pallas equivalent of BatchIdentity.forward(x, batch) == x.

    The truly free identity is `return x`; here we materialize a copy through
    a lane-dense Pallas streaming kernel so an actual TPU kernel runs.
    """
    del batch  # unused, exactly like the reference module
    return _identity_copy(x)


if __name__ == "__main__":
    key = jax.random.PRNGKey(0)
    k1, k2 = jax.random.split(key)

    # Node-feature matrix (ragged last dim) + per-node graph assignment (unused).
    num_nodes, feat = 16, 32
    x = jax.random.normal(k1, (num_nodes, feat), dtype=jnp.float32)
    batch = jnp.repeat(jnp.arange(2, dtype=jnp.int32), num_nodes // 2)
    out = batch_identity(x, batch)

    # Lane-dense case (size divides 1024 -> slab path).
    x2 = jax.random.normal(k2, (8, 128), dtype=jnp.float32)
    batch2 = jnp.zeros((8,), dtype=jnp.int32)
    out2 = batch_identity(x2, batch2)

    jax.block_until_ready((out, out2))

    assert out.shape == x.shape and out.dtype == x.dtype
    assert jnp.array_equal(out, x)
    assert out2.shape == x2.shape and out2.dtype == x2.dtype
    assert jnp.array_equal(out2, x2)
    print("KERNEL_OK")
</pallas_src>

<mosaic_0001>
module attributes {stable_mosaic.version = 11 : i64} {
  func.func @_copy_kernel(%arg0: i32, %arg1: memref<16x32xf32, #tpu.memory_space<vmem>>, %arg2: memref<16x32xf32, #tpu.memory_space<vmem>>) attributes {dimension_semantics = [#tpu.dimension_semantics<parallel>], iteration_bounds = array<i64: 1>, scalar_prefetch = 0 : i64, scratch_operands = 0 : i64, tpu.core_type = #tpu.core_type<tc>, window_params = [{transform_indices = @transform_0, window_bounds = array<i64: 16, 32>}, {transform_indices = @transform_1, window_bounds = array<i64: 16, 32>}]} {
    %c0 = arith.constant 0 : index
    %c0_0 = arith.constant 0 : index
    %0 = vector.load %arg1[%c0, %c0_0] : memref<16x32xf32, #tpu.memory_space<vmem>>, vector<16x32xf32>
    %c0_1 = arith.constant 0 : index
    %c0_2 = arith.constant 0 : index
    %1 = vector.load %arg2[%c0_1, %c0_2] : memref<16x32xf32, #tpu.memory_space<vmem>>, vector<16x32xf32>
    tpu.vector_store %arg2[%c0_1, %c0_2], %0 {strides = array<i32>} : memref<16x32xf32, #tpu.memory_space<vmem>>, vector<16x32xf32>,
    return
  }
  func.func @transform_0(%arg0: i32) -> (i32, i32) {
    %c0_i32 = arith.constant 0 : i32
    %c0_i32_0 = arith.constant 0 : i32
    return %arg0, %c0_i32 : i32, i32
  }
  func.func @transform_1(%arg0: i32) -> (i32, i32) {
    %c0_i32 = arith.constant 0 : i32
    %c0_i32_0 = arith.constant 0 : i32
    return %arg0, %c0_i32 : i32, i32
  }
}

</mosaic_0001>

<llo_original>
// kernel: tpu_custom_call.1
$region0: #{tpu_custom_call.1}
  #allocation0 [shape = 'u32[]', space=smem, size = 0x4, offset = 0x4, fixed_abs, tag = 'smem constant byte address 0x4 - core index']
  #allocation1 [shape = 'u32[144,128]{1,0:T(1,128)}', space=vmem, size = 0x12000, scoped, tag = 'internal scratch']
  %s0 = inlined_call_operand.hbm [shape: f32[16,32], index: 0, kind: input, shape index: {}]
  %s1 = inlined_call_operand.hbm [shape: f32[16,32], index: 1, kind: output, shape index: {}]
  %s2 = sld [smem:[#allocation0]]
  $region18: #{tpu_custom_call.1} parent=0
    _
  %s4 = ssub.s32 1, %s2
  %s5 = scalar_select 0, %s4, %s2
  $region1: #{tpu_custom_call.1} parent=0
    #allocation2 [shape = 'u8[8192]{0}', space=vmem, size = 0x2000, scoped, tag = 'input window, operand 0, single buffered']
    #allocation3 [shape = 's32[1]{0}', space=sflag, size = 0x4, scoped, tag = 'scoped memory for tpu_custom_call.1']
    #allocation4 [shape = 's32[1]{0}', space=sflag, size = 0x4, scoped, tag = 'scoped memory for tpu_custom_call.1']
    #allocation5 [shape = 'u8[8192]{0}', space=vmem, size = 0x2000, scoped, tag = 'output window, operand 0, single buffered']
    %6 = vsyncpa [#allocation3], 0
    %7 = vsyncpa [#allocation4], 0
    // Predicated region
    $region2: #{tpu_custom_call.1} parent=1 // pred_check
      _
    $region3: #{tpu_custom_call.1} parent=1 // pred_check_branch
      %9 = sbr.rel (0) target = $region5
    $region4: #{tpu_custom_call.1} parent=1 // pred_region
      %s11 = ssub.s32 256, 256
      %12 = vsyncadd [#allocation3], %s11
      %s13 = sshll.u32 [#allocation2], 4
      %s14 = int_to_ptr.vmem [resolvable:$true] %s13
      %19 = dma.hbm_to_vmem [thread:$0]  %s0, 256, %s14, [#allocation3], 128, 128, 8
    $region5: #{tpu_custom_call.1} parent=1 // pred_fallthru
      _
    // Predicated region
    $region6: #{tpu_custom_call.1} parent=1 // pred_check
      _
    $region7: #{tpu_custom_call.1} parent=1 // pred_check_branch
      %21 = sbr.rel (0) target = $region9
    $region8: #{tpu_custom_call.1} parent=1 // pred_region
      %22 = dma.done [#allocation3], 256
    $region9: #{tpu_custom_call.1} parent=1 // pred_fallthru
      _
    %v23 = vld [vmem:[#allocation2] sm:$0xff]
    %v24 = vld [vmem:[#allocation2 + $0x8] sm:$0xff]
    %vm25 = vcmask 261120
    %26 = vst.msk [vmem:[#allocation5] sm:$0xff] %vm25, %v23
    %27 = vst.msk [vmem:[#allocation5 + $0x8] sm:$0xff] %vm25, %v24
    // Predicated region
    $region10: #{tpu_custom_call.1} parent=1 // pred_check
      _
    $region11: #{tpu_custom_call.1} parent=1 // pred_check_branch
      %29 = sbr.rel (0) target = $region13
    $region12: #{tpu_custom_call.1} parent=1 // pred_region
      %s31 = ssub.s32 256, 256
      %32 = vsyncadd [#allocation4], %s31
      %s33 = sshll.u32 [#allocation5], 4
      %s34 = int_to_ptr.vmem [resolvable:$true] %s33
      %39 = dma.vmem_to_hbm [thread:$0]  %s34, 256, %s1, [#allocation4], 128, 128, 8
    $region13: #{tpu_custom_call.1} parent=1 // pred_fallthru
      _
    // Predicated region
    $region14: #{tpu_custom_call.1} parent=1 // pred_check
      _
    $region15: #{tpu_custom_call.1} parent=1 // pred_check_branch
      %41 = sbr.rel (0) target = $region17
    $region16: #{tpu_custom_call.1} parent=1 // pred_region
      %42 = dma.done [#allocation4], 256
    $region17: #{tpu_custom_call.1} parent=1 // pred_fallthru
      _
    %43 = vsyncpa [#allocation3], 1
    %44 = vsyncpa [#allocation4], 1

</llo_original>
